<compile_context>
chip_gen: v5e
topology: v5e:2x2
jax: 0.10.0
libtpu: 0.0.40
codegen_flags: <defaults>
</compile_context>

<pallas_src>
import functools

import jax
import jax.numpy as jnp
from jax.experimental import pallas as pl
from jax.experimental.pallas import tpu as pltpu

EMBEDDING_SIZE = 32
HIDDEN_SIZE = 4 * EMBEDDING_SIZE  # 128 — lane-dense intermediate


def _ffn_kernel(x_ref, w1_ref, b1_ref, w2_ref, b2_ref, o_ref, *, negative_slope):
    # x_ref: (TILE_N, E) row tile of the flattened (B*T, E) input.
    x = x_ref[...]

    # Linear 1: (TILE_N, E) @ (E, 4E) + (1, 4E) -> (TILE_N, 4E), f32 MXU accumulation.
    h = jnp.dot(x, w1_ref[...], preferred_element_type=jnp.float32) + b1_ref[...]

    # LeakyReLU (PyTorch default negative_slope = 0.01) — pure VPU select.
    h = jnp.where(h > 0, h, negative_slope * h)

    # Linear 2: (TILE_N, 4E) @ (4E, E) + (1, E) -> (TILE_N, E).
    y = jnp.dot(h, w2_ref[...], preferred_element_type=jnp.float32) + b2_ref[...]

    # TODO(synk): nn.Dropout(0.3) is eval-mode identity here; training-mode parity
    # would need a pltpu.prng_seed + pltpu.prng_random_bits Bernoulli mask with
    # 1/(1-p) scaling.
    o_ref[...] = y.astype(o_ref.dtype)


def _round_up(n, m):
    return ((n + m - 1) // m) * m


def feed_forward(x, w1, b1, w2, b2, *, negative_slope=0.01, max_tile_rows=512):
    """x: (B, T, E) f32; w1: (E, 4E); b1: (1, 4E); w2: (4E, E); b2: (1, E).

    Returns (B, T, E). Equivalent to the PyTorch FeedForwardNetwork forward in
    eval mode (dropout = identity). Weights are stored pre-transposed so the
    kernel computes x @ W (matches PyTorch's x @ W.T + b).
    """
    B, T, E = x.shape
    H = w1.shape[1]
    N = B * T
    x2d = x.reshape(N, E)

    # Row tile: single tile at toy sizes (sublane-aligned to 8), capped at
    # max_tile_rows (multiple of 256 -> also multiple of 128 for v5e's MXU)
    # so large N pipelines through VMEM instead of materializing everything.
    tile_n = min(_round_up(N, 8), max_tile_rows)
    n_pad = _round_up(N, tile_n)
    if n_pad != N:
        x2d = jnp.pad(x2d, ((0, n_pad - N), (0, 0)))
    grid = (n_pad // tile_n,)

    kernel = functools.partial(_ffn_kernel, negative_slope=negative_slope)

    itemsize = x.dtype.itemsize
    cost = pl.CostEstimate(
        flops=4 * n_pad * E * H,  # two (N,E)x(E,4E)-class matmuls
        transcendentals=0,
        bytes_accessed=(2 * n_pad * E + 2 * E * H + H + E) * itemsize,
    )

    out2d = pl.pallas_call(
        kernel,
        out_shape=jax.ShapeDtypeStruct((n_pad, E), x.dtype),
        grid=grid,
        in_specs=[
            pl.BlockSpec((tile_n, E), lambda i: (i, 0)),  # x row tile
            pl.BlockSpec((E, H), lambda i: (0, 0)),       # W1 — VMEM-resident
            pl.BlockSpec((1, H), lambda i: (0, 0)),       # b1 — VMEM-resident
            pl.BlockSpec((H, E), lambda i: (0, 0)),       # W2 — VMEM-resident
            pl.BlockSpec((1, E), lambda i: (0, 0)),       # b2 — VMEM-resident
        ],
        out_specs=pl.BlockSpec((tile_n, E), lambda i: (i, 0)),
        compiler_params=pltpu.CompilerParams(
            dimension_semantics=("parallel",),        # shard rows across TCs (v7x)
            vmem_limit_bytes=32 * 1024 * 1024,        # explicit, fits v5e/v6e/v7x
        ),
        cost_estimate=cost,
    )(x2d, w1, b1, w2, b2)

    return out2d[:N].reshape(B, T, E)


def _reference(x, w1, b1, w2, b2, negative_slope=0.01):
    h = x @ w1 + b1
    h = jnp.where(h > 0, h, negative_slope * h)
    return h @ w2 + b2  # dropout in eval mode == identity


if __name__ == "__main__":
    B, T, E = 2, 8, EMBEDDING_SIZE
    H = HIDDEN_SIZE

    key = jax.random.PRNGKey(0)
    kx, kw1, kb1, kw2, kb2 = jax.random.split(key, 5)

    x = jax.random.normal(kx, (B, T, E), dtype=jnp.float32)

    # nn.Linear(E, 4E): weight (4E, E), bias (4E,) — stored pre-transposed (E, 4E).
    bound1 = 1.0 / (E ** 0.5)
    w1 = jax.random.uniform(kw1, (E, H), jnp.float32, -bound1, bound1)
    b1 = jax.random.uniform(kb1, (1, H), jnp.float32, -bound1, bound1)

    # nn.Linear(4E, E): weight (E, 4E), bias (E,) — stored pre-transposed (4E, E).
    bound2 = 1.0 / (H ** 0.5)
    w2 = jax.random.uniform(kw2, (H, E), jnp.float32, -bound2, bound2)
    b2 = jax.random.uniform(kb2, (1, E), jnp.float32, -bound2, bound2)

    out = feed_forward(x, w1, b1, w2, b2)
    out = jax.block_until_ready(out)

    ref = _reference(x, w1, b1, w2, b2)
    assert out.shape == (B, T, E)
    assert jnp.allclose(out, ref, atol=1e-5, rtol=1e-5), "mismatch vs reference"

    print("KERNEL_OK")
</pallas_src>

<mosaic_0001>
module attributes {stable_mosaic.version = 11 : i64} {
  func.func @_ffn_kernel(%arg0: i32, %arg1: memref<16x32xf32, #tpu.memory_space<vmem>>, %arg2: memref<32x128xf32, #tpu.memory_space<vmem>>, %arg3: memref<1x128xf32, #tpu.memory_space<vmem>>, %arg4: memref<128x32xf32, #tpu.memory_space<vmem>>, %arg5: memref<1x32xf32, #tpu.memory_space<vmem>>, %arg6: memref<16x32xf32, #tpu.memory_space<vmem>>) attributes {dimension_semantics = [#tpu.dimension_semantics<parallel>], iteration_bounds = array<i64: 1>, scalar_prefetch = 0 : i64, scratch_operands = 0 : i64, tpu.core_type = #tpu.core_type<tc>, window_params = [{transform_indices = @transform_0, window_bounds = array<i64: 16, 32>}, {pipeline_mode = #tpu.pipeline_mode<synchronous>, transform_indices = @transform_1, window_bounds = array<i64: 32, 128>}, {pipeline_mode = #tpu.pipeline_mode<synchronous>, transform_indices = @transform_2, window_bounds = array<i64: 1, 128>}, {pipeline_mode = #tpu.pipeline_mode<synchronous>, transform_indices = @transform_3, window_bounds = array<i64: 128, 32>}, {pipeline_mode = #tpu.pipeline_mode<synchronous>, transform_indices = @transform_4, window_bounds = array<i64: 1, 32>}, {transform_indices = @transform_5, window_bounds = array<i64: 16, 32>}]} {
    %c0 = arith.constant 0 : index
    %c0_0 = arith.constant 0 : index
    %0 = vector.load %arg1[%c0, %c0_0] : memref<16x32xf32, #tpu.memory_space<vmem>>, vector<16x32xf32>
    %c0_1 = arith.constant 0 : index
    %c0_2 = arith.constant 0 : index
    %1 = vector.load %arg2[%c0_1, %c0_2] : memref<32x128xf32, #tpu.memory_space<vmem>>, vector<32x128xf32>
    %cst = arith.constant dense<0.000000e+00> : vector<16x128xf32>
    %2 = tpu.matmul %0, %1, %cst {dimension_numbers = #tpu.dot_dimension_numbers<[1], [0], [0], [1], [0, 0, 1, 1], [], []>} : vector<16x32xf32>, vector<32x128xf32>, vector<16x128xf32> -> vector<16x128xf32>
    %c0_3 = arith.constant 0 : index
    %c0_4 = arith.constant 0 : index
    %3 = vector.load %arg3[%c0_3, %c0_4] : memref<1x128xf32, #tpu.memory_space<vmem>>, vector<1x128xf32>
    %4 = vector.broadcast %3 : vector<1x128xf32> to vector<16x128xf32>
    %5 = arith.addf %2, %4 : vector<16x128xf32>
    %cst_5 = arith.constant 0.000000e+00 : f32
    %6 = vector.broadcast %cst_5 : f32 to vector<16x128xf32>
    %7 = arith.cmpf ogt, %5, %6 : vector<16x128xf32>
    %cst_6 = arith.constant 0.00999999977 : f32
    %8 = vector.broadcast %cst_6 : f32 to vector<16x128xf32>
    %9 = arith.mulf %8, %5 : vector<16x128xf32>
    %10 = arith.select %7, %5, %9 : vector<16x128xi1>, vector<16x128xf32>
    %c0_7 = arith.constant 0 : index
    %c0_8 = arith.constant 0 : index
    %11 = vector.load %arg4[%c0_7, %c0_8] : memref<128x32xf32, #tpu.memory_space<vmem>>, vector<128x32xf32>
    %cst_9 = arith.constant dense<0.000000e+00> : vector<16x32xf32>
    %12 = tpu.matmul %10, %11, %cst_9 {dimension_numbers = #tpu.dot_dimension_numbers<[1], [0], [0], [1], [0, 0, 1, 1], [], []>} : vector<16x128xf32>, vector<128x32xf32>, vector<16x32xf32> -> vector<16x32xf32>
    %c0_10 = arith.constant 0 : index
    %c0_11 = arith.constant 0 : index
    %13 = vector.load %arg5[%c0_10, %c0_11] : memref<1x32xf32, #tpu.memory_space<vmem>>, vector<1x32xf32>
    %14 = vector.broadcast %13 : vector<1x32xf32> to vector<16x32xf32>
    %15 = arith.addf %12, %14 : vector<16x32xf32>
    %c0_12 = arith.constant 0 : index
    %c0_13 = arith.constant 0 : index
    %16 = vector.load %arg6[%c0_12, %c0_13] : memref<16x32xf32, #tpu.memory_space<vmem>>, vector<16x32xf32>
    tpu.vector_store %arg6[%c0_12, %c0_13], %15 {strides = array<i32>} : memref<16x32xf32, #tpu.memory_space<vmem>>, vector<16x32xf32>,
    return
  }
  func.func @transform_0(%arg0: i32) -> (i32, i32) {
    %c0_i32 = arith.constant 0 : i32
    %c0_i32_0 = arith.constant 0 : i32
    return %arg0, %c0_i32 : i32, i32
  }
  func.func @transform_1(%arg0: i32) -> (i32, i32) {
    %c0_i32 = arith.constant 0 : i32
    %c0_i32_0 = arith.constant 0 : i32
    %c0_i32_1 = arith.constant 0 : i32
    return %c0_i32, %c0_i32_0 : i32, i32
  }
  func.func @transform_2(%arg0: i32) -> (i32, i32) {
    %c0_i32 = arith.constant 0 : i32
    %c0_i32_0 = arith.constant 0 : i32
    %c0_i32_1 = arith.constant 0 : i32
    return %c0_i32, %c0_i32_0 : i32, i32
  }
  func.func @transform_3(%arg0: i32) -> (i32, i32) {
    %c0_i32 = arith.constant 0 : i32
    %c0_i32_0 = arith.constant 0 : i32
    %c0_i32_1 = arith.constant 0 : i32
    return %c0_i32, %c0_i32_0 : i32, i32
  }
  func.func @transform_4(%arg0: i32) -> (i32, i32) {
    %c0_i32 = arith.constant 0 : i32
    %c0_i32_0 = arith.constant 0 : i32
    %c0_i32_1 = arith.constant 0 : i32
    return %c0_i32, %c0_i32_0 : i32, i32
  }
  func.func @transform_5(%arg0: i32) -> (i32, i32) {
    %c0_i32 = arith.constant 0 : i32
    %c0_i32_0 = arith.constant 0 : i32
    return %arg0, %c0_i32 : i32, i32
  }
}

</mosaic_0001>

<llo_original>
// kernel: tpu_custom_call.1
$region0: #{tpu_custom_call.1}
  #allocation0 [shape = 'u32[]', space=smem, size = 0x4, offset = 0x4, fixed_abs, tag = 'smem constant byte address 0x4 - core index']
  #allocation1 [shape = 'u32[72,128]{1,0:T(1,128)}', space=vmem, size = 0x9000, scoped, tag = 'internal scratch']
  %s0 = inlined_call_operand.vmem [shape: f32[16,32], index: 0, kind: input, shape index: {}]
  %s1 = inlined_call_operand.vmem [shape: f32[32,128], index: 1, kind: input, shape index: {}]
  %s2 = inlined_call_operand.vmem [shape: f32[1,128], index: 2, kind: input, shape index: {}]
  %s3 = inlined_call_operand.vmem [shape: f32[128,32], index: 3, kind: input, shape index: {}]
  %s4 = inlined_call_operand.vmem [shape: f32[1,32], index: 4, kind: input, shape index: {}]
  %s5 = inlined_call_operand.hbm [shape: f32[16,32], index: 5, kind: output, shape index: {}]
  %s6 = sld [smem:[#allocation0]]
  $region30: #{tpu_custom_call.1} parent=0
    _
  %s8 = ssub.s32 1, %s6
  %s9 = scalar_select 0, %s8, %s6
  $region1: #{tpu_custom_call.1} parent=0
    #allocation2 [shape = 'u8[8192]{0}', space=vmem, size = 0x2000, scoped, tag = 'output window, operand 0, single buffered']
    #allocation3 [shape = 's32[1]{0}', space=sflag, size = 0x4, scoped, tag = 'scoped memory for tpu_custom_call.1']
    %10 = vsyncpa [#allocation3], 0
    // Predicated region
    $region2: #{tpu_custom_call.1} parent=1 // pred_check
      _
    $region3: #{tpu_custom_call.1} parent=1 // pred_check_branch
      %12 = sbr.rel (0) target = $region5
    $region4: #{tpu_custom_call.1} parent=1 // pred_region
      _
    $region5: #{tpu_custom_call.1} parent=1 // pred_fallthru
      _
    // Predicated region
    $region6: #{tpu_custom_call.1} parent=1 // pred_check
      _
    $region7: #{tpu_custom_call.1} parent=1 // pred_check_branch
      %14 = sbr.rel (0) target = $region9
    $region8: #{tpu_custom_call.1} parent=1 // pred_region
      _
    $region9: #{tpu_custom_call.1} parent=1 // pred_fallthru
      _
    // Predicated region
    $region10: #{tpu_custom_call.1} parent=1 // pred_check
      _
    $region11: #{tpu_custom_call.1} parent=1 // pred_check_branch
      %16 = sbr.rel (0) target = $region13
    $region12: #{tpu_custom_call.1} parent=1 // pred_region
      _
    $region13: #{tpu_custom_call.1} parent=1 // pred_fallthru
      _
    // Predicated region
    $region14: #{tpu_custom_call.1} parent=1 // pred_check
      _
    $region15: #{tpu_custom_call.1} parent=1 // pred_check_branch
      %18 = sbr.rel (0) target = $region17
    $region16: #{tpu_custom_call.1} parent=1 // pred_region
      _
    $region17: #{tpu_custom_call.1} parent=1 // pred_fallthru
      _
    // Predicated region
    $region18: #{tpu_custom_call.1} parent=1 // pred_check
      _
    $region19: #{tpu_custom_call.1} parent=1 // pred_check_branch
      %20 = sbr.rel (0) target = $region21
    $region20: #{tpu_custom_call.1} parent=1 // pred_region
      _
    $region21: #{tpu_custom_call.1} parent=1 // pred_fallthru
      _
    %v21 = vld [vmem:[%s0] sm:$0xff]
    %v22 = vld [vmem:[%s0 + $0x8] sm:$0xff]
    %v23 = vld [vmem:[%s1] sm:$0xff]
    %v24 = vld [vmem:[%s1 + $0x8] sm:$0xff]
    %v25 = vld [vmem:[%s1 + $0x10] sm:$0xff]
    %v26 = vld [vmem:[%s1 + $0x18] sm:$0xff]
    %v27 = vld [vmem:[%s2] sm:$0x1]
    %v29 = vperm.slane %v27, 0
    %vm31 = vcmask 261120
    %v33 = vsel %vm31, %v21, 0
    %v36 = vsel %vm31, %v22, 0
    %38 = vmatpush.msra.mxu0 0.0
    %39 = vmatpush.msra.mxu0 0.0
    %40 = vmatpush.msra.mxu0 0.0
    %41 = vmatpush.msra.mxu0 0.0
    %42 = vmatpush.msra.mxu0 0.0
    %43 = vmatpush.msra.mxu0 0.0
    %44 = vmatpush.msra.mxu0 0.0
    %45 = vmatpush.msra.mxu0 0.0
    %46 = vmatpush.msra.mxu0 0.0
    %47 = vmatpush.msra.mxu0 0.0
    %48 = vmatpush.msra.mxu0 0.0
    %49 = vmatpush.msra.mxu0 0.0
    %50 = vmatpush.msra.mxu0 %v26
    %51 = vmatpush.msra.mxu0 %v25
    %52 = vmatpush.msra.mxu0 %v24
    %53 = vmatpush.msra.mxu0 %v23
    %54 = vmatmul.f32.gmra.mxu0 %v33
    %v55 = vpop.f32.mrf.mxu0
    %v56 = vadd.f32 %v29, %v55
    %57 = vmatmul.f32.gmra.mxu0 %v36
    %v58 = vpop.f32.mrf.mxu0
    %v59 = vadd.f32 %v29, %v58
    %60 = vdwg.mxu0
    %vm61 = vcmp.gt.f32.partialorder %v56, 0.0
    %vm62 = vcmp.gt.f32.partialorder %v59, 0.0
    %v63 = vmul.f32 %v56, 0.01
    %v64 = vmul.f32 %v59, 0.01
    %v65 = vsel %vm61, %v56, %v63
    %v66 = vsel %vm62, %v59, %v64
    %v67 = vld [vmem:[%s3] sm:$0xff]
    %v68 = vld [vmem:[%s3 + $0x8] sm:$0xff]
    %v69 = vld [vmem:[%s3 + $0x10] sm:$0xff]
    %v70 = vld [vmem:[%s3 + $0x18] sm:$0xff]
    %v71 = vld [vmem:[%s3 + $0x20] sm:$0xff]
    %v72 = vld [vmem:[%s3 + $0x28] sm:$0xff]
    %v73 = vld [vmem:[%s3 + $0x30] sm:$0xff]
    %v74 = vld [vmem:[%s3 + $0x38] sm:$0xff]
    %v75 = vld [vmem:[%s3 + $0x40] sm:$0xff]
    %v76 = vld [vmem:[%s3 + $0x48] sm:$0xff]
    %v77 = vld [vmem:[%s3 + $0x50] sm:$0xff]
    %v78 = vld [vmem:[%s3 + $0x58] sm:$0xff]
    %v79 = vld [vmem:[%s3 + $0x60] sm:$0xff]
    %v80 = vld [vmem:[%s3 + $0x68] sm:$0xff]
    %v81 = vld [vmem:[%s3 + $0x70] sm:$0xff]
    %v82 = vld [vmem:[%s3 + $0x78] sm:$0xff]
    %v83 = vld [vmem:[%s4] sm:$0x1]
    %v85 = vperm.slane %v83, 0
    %87 = vmatpush.msra.mxu0 %v82
    %88 = vmatpush.msra.mxu0 %v81
    %89 = vmatpush.msra.mxu0 %v80
    %90 = vmatpush.msra.mxu0 %v79
    %91 = vmatpush.msra.mxu0 %v78
    %92 = vmatpush.msra.mxu0 %v77
    %93 = vmatpush.msra.mxu0 %v76
    %94 = vmatpush.msra.mxu0 %v75
    %95 = vmatpush.msra.mxu0 %v74
    %96 = vmatpush.msra.mxu0 %v73
    %97 = vmatpush.msra.mxu0 %v72
    %98 = vmatpush.msra.mxu0 %v71
    %99 = vmatpush.msra.mxu0 %v70
    %100 = vmatpush.msra.mxu0 %v69
    %101 = vmatpush.msra.mxu0 %v68
    %102 = vmatpush.msra.mxu0 %v67
    %103 = vmatmul.f32.gmra.mxu0 %v65
    %v104 = vpop.f32.mrf.mxu0
    %v105 = vadd.f32 %v85, %v104
    %106 = vmatmul.f32.gmra.mxu0 %v66
    %v107 = vpop.f32.mrf.mxu0
    %v108 = vadd.f32 %v85, %v107
    %109 = vdwg.mxu0
    %110 = vst.msk [vmem:[#allocation2] sm:$0xff] %vm31, %v105
    %111 = vst.msk [vmem:[#allocation2 + $0x8] sm:$0xff] %vm31, %v108
    // Predicated region
    $region22: #{tpu_custom_call.1} parent=1 // pred_check
      _
    $region23: #{tpu_custom_call.1} parent=1 // pred_check_branch
      %113 = sbr.rel (0) target = $region25
    $region24: #{tpu_custom_call.1} parent=1 // pred_region
      %115 = vsyncadd [#allocation3], 0
      %s116 = sshll.u32 [#allocation2], 4
      %s117 = int_to_ptr.vmem [resolvable:$true] %s116
      %s118 = sshll.u32 %s5, 4
      %s119 = int_to_ptr.hbm [resolvable:$true] %s118
      %124 = dma.vmem_to_hbm [thread:$0]  %s117, 256, %s119, [#allocation3], 128, 128, 8
    $region25: #{tpu_custom_call.1} parent=1 // pred_fallthru
      _
    // Predicated region
    $region26: #{tpu_custom_call.1} parent=1 // pred_check
      _
    $region27: #{tpu_custom_call.1} parent=1 // pred_check_branch
      %126 = sbr.rel (0) target = $region29
    $region28: #{tpu_custom_call.1} parent=1 // pred_region
      %128 = dma.done [#allocation3], 256
    $region29: #{tpu_custom_call.1} parent=1 // pred_fallthru
      _
    %129 = vsyncpa [#allocation3], 1

</llo_original>
